<compile_context>
chip_gen: v6e
topology: v6e:2x2x1
jax: 0.10.0
libtpu: 0.0.40
codegen_flags: <defaults>
</compile_context>

<pallas_src>
from typing import NamedTuple

import numpy as np
import jax
import jax.numpy as jnp
from jax.experimental import pallas as pl
from jax.experimental.pallas import tpu as pltpu

ENC_LEN = 150
_LANES = 128                           # TPU lane width
_TARGET_BLOCK_BYTES = 4 << 20          # ~4 MiB x/out blocks
_MIN_BLOCK_BYTES = 512 << 10
_VMEM_LIMIT_BYTES = 32 * 1024 * 1024   # above v5e's 16 MiB scoped default; safe on v7x (64 MiB phys)


def make_positional_encoding(d_model: int, max_len: int = ENC_LEN,
                             dtype=jnp.float32) -> jnp.ndarray:
    """Deterministic sin/cos table, identical to the PyTorch __init__."""
    pos = np.arange(0, max_len, dtype=np.float32)[:, None]                     # (max_len, 1)
    div = np.exp(np.arange(0, d_model, 2, dtype=np.float32)
                 * (-np.log(10000.0) / d_model))                               # (ceil(d/2),)
    pe = np.zeros((max_len, d_model), dtype=np.float32)
    pe[:, 0::2] = np.sin(pos * div)
    pe[:, 1::2] = np.cos(pos * div[: d_model // 2])
    return jnp.asarray(pe, dtype=dtype)


def _sublane(dtype) -> int:
    # packed-row alignment: 8 rows (f32), 16 (bf16/f16), 32 (int8/fp8)
    return max(8, 32 // np.dtype(dtype).itemsize)


class _Plan(NamedTuple):
    D_pad: int          # last dim after optional lane padding
    S2: int             # rows of the lane-dense 2-D plane
    D2: int             # lanes of the lane-dense 2-D plane
    tile_rows: int      # rows per x/out block
    n_seq_tiles: int    # cdiv(S2, tile_rows)
    S2p: int            # n_seq_tiles * tile_rows (pe padded to this)


def _plan_layout(B: int, S: int, D: int, dtype) -> _Plan:
    itemsize = np.dtype(dtype).itemsize

    # ---- lane-dense last dim ------------------------------------------------
    if D % _LANES == 0:
        D_pad, S2, D2 = D, S, D
    elif (S * D) % _LANES == 0:
        D_pad, S2, D2 = D, (S * D) // _LANES, _LANES        # re-view plane as (S*D/128, 128)
    else:
        residue = (-D) % _LANES
        if D >= _LANES and residue * 4 <= D:                 # pad <= 25%: full unmasked vst
            D_pad, S2, D2 = D + residue, S, D + residue
        else:                                                # tiny D: masked-lane fallback
            D_pad, S2, D2 = D, S, D

    # ---- sublane-aligned row tile under a VMEM budget -----------------------
    sub = _sublane(dtype)
    pe_bytes = S2 * D2 * itemsize                            # resident pe (estimate)
    budget = max(_MIN_BLOCK_BYTES,
                 (_VMEM_LIMIT_BYTES - 2 * pe_bytes - (1 << 20)) // 4)
    target = min(_TARGET_BLOCK_BYTES, budget)
    row_bytes = max(1, D2 * itemsize)
    max_rows = max(1, target // row_bytes)
    tile_rows = (max_rows // sub) * sub
    if tile_rows == 0:
        tile_rows = sub
    tile_rows = min(S2, tile_rows)
    n_seq_tiles = -(-S2 // tile_rows)

    # ---- v7x megacore: guarantee >= 2 grid steps when there is enough work --
    if n_seq_tiles == 1 and B == 1 and S2 >= 2 * sub:
        tile_rows = max(sub, ((S2 // 2) // sub) * sub)
        n_seq_tiles = -(-S2 // tile_rows)

    return _Plan(D_pad, S2, D2, tile_rows, n_seq_tiles, n_seq_tiles * tile_rows)


def _make_pe_add_kernel(tile_rows: int):
    aligned = (tile_rows % 8 == 0)

    def kernel(x_ref, pe_ref, o_ref):
        # x_ref / o_ref: (tile_rows, D2) for the current (seq-tile, batch) block.
        # pe_ref: the full resident (S2p, D2) table; slice the matching rows.
        start = pl.program_id(0) * tile_rows
        if aligned:
            start = pl.multiple_of(start, 8)
        o_ref[...] = x_ref[...] + pe_ref[pl.ds(start, tile_rows), :]

    return kernel


class PositionalEncodingPallas:
    """Pallas-TPU equivalent of the PyTorch PositionalEncoding module."""

    def __init__(self, d_model: int, max_len: int = ENC_LEN, dtype=jnp.float32):
        self.d_model = d_model
        self.max_len = max_len
        self.pe = make_positional_encoding(d_model, max_len, dtype=dtype)
        self._pe_cache = {}   # (S, dtype, plan) -> lane-dense, row-padded pe block

    def _prepared_pe(self, S: int, dtype, plan: _Plan):
        key = (S, np.dtype(dtype).str, plan)
        pe2 = self._pe_cache.get(key)
        if pe2 is None:
            pe_s = self.pe[:S, :].astype(dtype)                          # (S, D)
            if plan.D_pad != self.d_model:
                pe_s = jnp.pad(pe_s, ((0, 0), (0, plan.D_pad - self.d_model)))
            pe2 = pe_s.reshape(plan.S2, plan.D2)
            if plan.S2p != plan.S2:
                pe2 = jnp.pad(pe2, ((0, plan.S2p - plan.S2), (0, 0)))
            pe2 = jax.block_until_ready(pe2)   # hoisted: paid once per (S, dtype, layout)
            self._pe_cache[key] = pe2
        return pe2

    def __call__(self, x: jnp.ndarray) -> jnp.ndarray:
        B, S, D = x.shape
        if D != self.d_model:
            raise ValueError(f"expected d_model={self.d_model}, got {D}")
        if S > self.max_len:
            raise ValueError(
                f"sequence length {S} exceeds positional-encoding max_len {self.max_len}")

        plan = _plan_layout(B, S, D, x.dtype)
        pe2 = self._prepared_pe(S, x.dtype, plan)

        if plan.D_pad != D:
            x = jnp.pad(x, ((0, 0), (0, 0), (0, plan.D_pad - D)))
        x2 = x.reshape(B, plan.S2, plan.D2)

        out2 = pl.pallas_call(
            _make_pe_add_kernel(plan.tile_rows),
            out_shape=jax.ShapeDtypeStruct((B, plan.S2, plan.D2), x.dtype),
            grid_spec=pltpu.PrefetchScalarGridSpec(
                num_scalar_prefetch=0,
                grid=(plan.n_seq_tiles, B),     # seq tiles outer, batch inner
                in_specs=[
                    # per-(seq-tile, batch) x block; batch dim squeezed in-kernel
                    pl.BlockSpec((pl.Squeezed(), plan.tile_rows, plan.D2),
                                 lambda s, b: (b, s, 0)),
                    # pe: one fully-resident block, fetched once, never re-DMA'd
                    pl.BlockSpec((plan.S2p, plan.D2), lambda s, b: (0, 0)),
                ],
                out_specs=pl.BlockSpec((pl.Squeezed(), plan.tile_rows, plan.D2),
                                       lambda s, b: (b, s, 0)),
            ),
            compiler_params=pltpu.CompilerParams(
                dimension_semantics=("parallel", "parallel"),   # megacore-friendly on v7x
                vmem_limit_bytes=_VMEM_LIMIT_BYTES,
            ),
        )(x2, pe2)

        out = out2.reshape(B, S, plan.D_pad)
        if plan.D_pad != D:
            out = out[..., :D]
        return out


if __name__ == "__main__":
    B, S, D = 2, 8, 32   # batch=2, seq=8, d_model=32  (S <= ENC_LEN)

    key = jax.random.PRNGKey(0)
    x = jax.random.normal(key, (B, S, D), dtype=jnp.float32)

    pos_enc = PositionalEncodingPallas(D, max_len=ENC_LEN)

    ref = np.asarray(x) + np.asarray(pos_enc.pe)[:S, :][None, :, :]

    out = pos_enc(x)
    out = jax.block_until_ready(out)

    np.testing.assert_allclose(np.asarray(out), ref, rtol=1e-6, atol=1e-6)
    print("KERNEL_OK")
</pallas_src>

<mosaic_0001>
module attributes {stable_mosaic.version = 11 : i64} {
  func.func @kernel(%arg0: i32, %arg1: i32, %arg2: memref<1x2x128xf32, #tpu.memory_space<vmem>>, %arg3: memref<2x128xf32, #tpu.memory_space<vmem>>, %arg4: memref<1x2x128xf32, #tpu.memory_space<vmem>>) attributes {dimension_semantics = [#tpu.dimension_semantics<parallel>, #tpu.dimension_semantics<parallel>], iteration_bounds = array<i64: 1, 2>, scalar_prefetch = 0 : i64, scratch_operands = 0 : i64, tpu.core_type = #tpu.core_type<tc>, window_params = [{transform_indices = @transform_0, window_bounds = array<i64: 1, 2, 128>}, {pipeline_mode = #tpu.pipeline_mode<synchronous>, transform_indices = @transform_1, window_bounds = array<i64: 2, 128>}, {transform_indices = @transform_2, window_bounds = array<i64: 1, 2, 128>}]} {
    %c2_i32 = arith.constant 2 : i32
    %0 = arith.muli %arg0, %c2_i32 : i32
    %c0 = arith.constant 0 : index
    %c0_0 = arith.constant 0 : index
    %c0_1 = arith.constant 0 : index
    %1 = vector.load %arg2[%c0, %c0_0, %c0_1] : memref<1x2x128xf32, #tpu.memory_space<vmem>>, vector<1x2x128xf32>
    %2 = vector.shape_cast %1 : vector<1x2x128xf32> to vector<2x128xf32>
    %3 = arith.index_cast %0 : i32 to index
    %c0_2 = arith.constant 0 : index
    %4 = vector.load %arg3[%3, %c0_2] : memref<2x128xf32, #tpu.memory_space<vmem>>, vector<2x128xf32>
    %5 = arith.addf %2, %4 : vector<2x128xf32>
    %c0_3 = arith.constant 0 : index
    %c0_4 = arith.constant 0 : index
    %c0_5 = arith.constant 0 : index
    %6 = vector.load %arg4[%c0_3, %c0_4, %c0_5] : memref<1x2x128xf32, #tpu.memory_space<vmem>>, vector<1x2x128xf32>
    %7 = vector.shape_cast %6 : vector<1x2x128xf32> to vector<2x128xf32>
    %8 = vector.shape_cast %5 : vector<2x128xf32> to vector<1x2x128xf32>
    tpu.vector_store %arg4[%c0_3, %c0_4, %c0_5], %8 {strides = array<i32>} : memref<1x2x128xf32, #tpu.memory_space<vmem>>, vector<1x2x128xf32>,
    return
  }
  func.func @transform_0(%arg0: i32, %arg1: i32) -> (i32, i32, i32) {
    %c0_i32 = arith.constant 0 : i32
    %c0_i32_0 = arith.constant 0 : i32
    return %arg1, %arg0, %c0_i32 : i32, i32, i32
  }
  func.func @transform_1(%arg0: i32, %arg1: i32) -> (i32, i32) {
    %c0_i32 = arith.constant 0 : i32
    %c0_i32_0 = arith.constant 0 : i32
    %c0_i32_1 = arith.constant 0 : i32
    return %c0_i32, %c0_i32_0 : i32, i32
  }
  func.func @transform_2(%arg0: i32, %arg1: i32) -> (i32, i32, i32) {
    %c0_i32 = arith.constant 0 : i32
    %c0_i32_0 = arith.constant 0 : i32
    return %arg1, %arg0, %c0_i32 : i32, i32, i32
  }
}

</mosaic_0001>

<llo_original>
// kernel: tpu_custom_call.1
$region0: #{tpu_custom_call.1}
  #allocation0 [shape = 'u32[]', space=smem, size = 0x4, offset = 0x4, fixed_abs, tag = 'smem constant byte address 0x4 - core index']
  #allocation1 [shape = 'u32[144,128]{1,0:T(1,128)}', space=vmem, size = 0x12000, scoped, tag = 'internal scratch']
  %s0 = inlined_call_operand.hbm [shape: f32[2,2,128], index: 0, kind: input, shape index: {}]
  %s1 = inlined_call_operand.hbm [shape: f32[2,128], index: 1, kind: input, shape index: {}]
  %s2 = inlined_call_operand.hbm [shape: f32[2,2,128], index: 2, kind: output, shape index: {}]
  %s3 = sld [smem:[#allocation0]]
  $region49: #{tpu_custom_call.1} parent=0
    _
  %s5 = ssub.s32 1, %s3
  %s6 = scalar_select 0, %s5, %s3
  $region1: #{tpu_custom_call.1} parent=0
    #allocation2 [shape = 'u8[2048]{0}', space=vmem, size = 0x800, scoped, tag = 'input window, operand 0']
    #allocation3 [shape = 's32[2]{0}', space=sflag, size = 0x8, scoped, tag = 'scoped memory for tpu_custom_call.1']
    #allocation4 [shape = 's32[2]{0}', space=sflag, size = 0x8, scoped, tag = 'scoped memory for tpu_custom_call.1']
    #allocation5 [shape = 'u8[1024]{0}', space=vmem, size = 0x400, scoped, tag = 'input window, operand 1, single buffered']
    #allocation6 [shape = 's32[1]{0}', space=sflag, size = 0x4, scoped, tag = 'scoped memory for tpu_custom_call.1']
    #allocation7 [shape = 'u8[2048]{0}', space=vmem, size = 0x800, scoped, tag = 'output window, operand 0']
    %7 = vsyncpa [#allocation3], 0
    %s8 = scalar_lea.sflag [#allocation3], 1
    %9 = vsyncpa %s8, 0
    %10 = vsyncpa [#allocation6], 0
    %11 = vsyncpa [#allocation4], 0
    %s12 = scalar_lea.sflag [#allocation4], 1
    %13 = vsyncpa %s12, 0
    loop: start=0, step=1, limit=4
    $region2: #{tpu_custom_call.1} parent=1 // loop_pre_header
      _
    $region3: #{tpu_custom_call.1} parent=1 // loop_header
      %s15 = sphi 0, %s19
      %p16 = scmp.ge.s32.totalorder %s15, 4
      %s22 = sphi 0, %s34
      %s23 = sphi 0, %s30
      %s24 = sphi 0, %s22
      %s25 = sphi 0, %s23
      %s26 = sphi 0, %s24
      %s27 = sphi 0, %s25
      %s39 = sphi 0, %s41
      %s42 = sphi 0, %s39
      %s43 = sphi 0, %s42
      %s59 = sphi 0, %s43
      %s63 = sphi 0, %s63
      %s65 = sphi 0, %s63
      %s66 = sphi 0, %s65
      %s80 = sphi 0, %s66
      %s88 = sphi 0, %s90
      %s91 = sphi 0, %s88
      %s92 = sphi 0, %s91
      %s108 = sphi 0, %s92
    $region4: #{tpu_custom_call.1} parent=1 // loop_header_branch
      %18 = sbr.rel (%p16) target = $region8
    $region5: #{tpu_custom_call.1} parent=1 // loop_body
      %s20 = ssub.s32 %s15, 1
      %s21 = ssub.s32 %s15, 2
      %s28 = sadd.s32 1, %s23
      %p29 = scmp.ge.s32.totalorder %s28, 2
      %s30 = scalar_select %p29, 0, %s28
      %s31 = sadd.s32 1, %s22
      %s32 = scalar_select %p29, %s31, %s22
      %p33 = scmp.ge.s32.totalorder %s32, 1
      %s34 = scalar_select %p33, 0, %s32
      %s35 = ssub.s32 %s23, %s30
      %s36 = ssub.s32 %s22, %s34
      %s37 = sor.u32 %s35, %s36
      %p38 = scmp.eq.s32.totalorder %s37, 0
      %s40 = sadd.s32 %s39, 1
      %s41 = scalar_select %p38, %s39, %s40
      %p44 = pneg %p38
      %p45 = scmp.eq.s32.totalorder %s15, 1
      %p46 = por %p44, %p45
      %p47 = scmp.ne.s32.totalorder %s39, %s42
      %p48 = scmp.eq.s32.totalorder %s15, 0
      %p49 = por %p47, %p48
      %p50 = scmp.ne.s32.totalorder %s39, %s42
      %p51 = scmp.eq.s32.totalorder %s20, 1
      %p52 = por %p50, %p51
      %p53 = scmp.ne.s32.totalorder %s42, %s43
      %p54 = scmp.eq.s32.totalorder %s20, 0
      %p55 = por %p53, %p54
      %p56 = scmp.ne.s32.totalorder %s42, %s43
      %p57 = scmp.eq.s32.totalorder %s21, 1
      %p58 = por %p56, %p57
      %p60 = scmp.ne.s32.totalorder %s43, %s59
      %p61 = scmp.eq.s32.totalorder %s21, 0
      %p62 = por %p60, %p61
      %s64 = sadd.s32 %s63, 1
      %p67 = scmp.eq.s32.totalorder %s15, 1
      %p68 = scmp.ne.s32.totalorder %s63, %s65
      %p69 = scmp.eq.s32.totalorder %s15, 0
      %p70 = por %p68, %p69
      %p71 = scmp.ne.s32.totalorder %s63, %s65
      %p72 = scmp.eq.s32.totalorder %s20, 1
      %p73 = por %p71, %p72
      %p74 = scmp.ne.s32.totalorder %s65, %s66
      %p75 = scmp.eq.s32.totalorder %s20, 0
      %p76 = por %p74, %p75
      %p77 = scmp.ne.s32.totalorder %s65, %s66
      %p78 = scmp.eq.s32.totalorder %s21, 1
      %p79 = por %p77, %p78
      %p81 = scmp.ne.s32.totalorder %s66, %s80
      %p82 = scmp.eq.s32.totalorder %s21, 0
      %p83 = por %p81, %p82
      %s84 = ssub.s32 %s23, %s30
      %s85 = ssub.s32 %s22, %s34
      %s86 = sor.u32 %s84, %s85
      %p87 = scmp.eq.s32.totalorder %s86, 0
      %s89 = sadd.s32 %s88, 1
      %s90 = scalar_select %p87, %s88, %s89
      %p93 = pneg %p87
      %p94 = scmp.eq.s32.totalorder %s15, 1
      %p95 = por %p93, %p94
      %p96 = scmp.ne.s32.totalorder %s88, %s91
      %p97 = scmp.eq.s32.totalorder %s15, 0
      %p98 = por %p96, %p97
      %p99 = scmp.ne.s32.totalorder %s88, %s91
      %p100 = scmp.eq.s32.totalorder %s20, 1
      %p101 = por %p99, %p100
      %p102 = scmp.ne.s32.totalorder %s91, %s92
      %p103 = scmp.eq.s32.totalorder %s20, 0
      %p104 = por %p102, %p103
      %p105 = scmp.ne.s32.totalorder %s91, %s92
      %p106 = scmp.eq.s32.totalorder %s21, 1
      %p107 = por %p105, %p106
      %p109 = scmp.ne.s32.totalorder %s92, %s108
      %p110 = scmp.eq.s32.totalorder %s21, 0
      %p111 = por %p109, %p110
      %p112 = scmp.le.s32.totalorder 1, %s15
      %p113 = scmp.lt.s32.totalorder %s15, 3
      %p114 = pnand %p112, %p113
      %p115 = pneg %p114
      // Predicated region
      $region9: #{tpu_custom_call.1} parent=5 // pred_check
        _
      $region10: #{tpu_custom_call.1} parent=5 // pred_check_branch
        %117 = sbr.rel (%p114) target = $region12
      $region11: #{tpu_custom_call.1} parent=5 // pred_region
        %s118 = ssub.s32 %s15, 1
        // Predicated region
        $region13: #{tpu_custom_call.1} parent=11 // pred_check
          %p119 = pneg %p76
        $region14: #{tpu_custom_call.1} parent=11 // pred_check_branch
          %121 = sbr.rel (%p119) target = $region16
        $region15: #{tpu_custom_call.1} parent=11 // pred_region
          %s123 = ssub.s32 32, 32
          %124 = vsyncadd [#allocation6], %s123
          %s126 = sshll.u32 [#allocation5], 4
          %s127 = int_to_ptr.vmem [resolvable:$true] %s126
          %129 = dma.hbm_to_vmem [thread:$0]  %s1, 32, %s127, [#allocation6]
        $region16: #{tpu_custom_call.1} parent=11 // pred_fallthru
          _
      $region12: #{tpu_custom_call.1} parent=5 // pred_fallthru
        _
      %p130 = scmp.lt.s32.totalorder %s15, 2
      // Predicated region
      $region17: #{tpu_custom_call.1} parent=5 // pred_check
        %p131 = pneg %p130
      $region18: #{tpu_custom_call.1} parent=5 // pred_check_branch
        %133 = sbr.rel (%p131) target = $region20
      $region19: #{tpu_custom_call.1} parent=5 // pred_region
        // Predicated region
        $region21: #{tpu_custom_call.1} parent=19 // pred_check
          %p134 = pneg %p49
        $region22: #{tpu_custom_call.1} parent=19 // pred_check_branch
          %136 = sbr.rel (%p134) target = $region24
        $region23: #{tpu_custom_call.1} parent=19 // pred_region
          %s137 = sand.u32 %s39, 1
          %s138 = scalar_lea.sflag [#allocation3], %s137
          %s139 = sand.u32 %s39, 1
          %s140 = smul.addr %s139, 2
          %s141 = scalar_lea.vmem [#allocation2], %s140
          %s143 = ssub.s32 32, 32
          %144 = vsyncadd %s138, %s143
          %s145 = sadd.s32 %s22, %s23
          %s146 = smul.addr %s145, 32
          %s147 = scalar_lea.hbm %s0, %s146
          %s149 = sshll.u32 %s141, 4
          %s150 = int_to_ptr.vmem [resolvable:$true] %s149
          %152 = dma.hbm_to_vmem [thread:$0]  %s147, 32, %s150, %s138
        $region24: #{tpu_custom_call.1} parent=19 // pred_fallthru
          _
      $region20: #{tpu_custom_call.1} parent=5 // pred_fallthru
        _
      %p153 = scmp.le.s32.totalorder 1, %s15
      %p154 = scmp.lt.s32.totalorder %s15, 3
      %p155 = pnand %p153, %p154
      %p156 = pneg %p155
      // Predicated region
      $region25: #{tpu_custom_call.1} parent=5 // pred_check
        _
      $region26: #{tpu_custom_call.1} parent=5 // pred_check_branch
        %158 = sbr.rel (%p155) target = $region28
      $region27: #{tpu_custom_call.1} parent=5 // pred_region
        %s159 = ssub.s32 %s15, 1
        %s160 = sand.u32 %s42, 1
        %s161 = scalar_lea.sflag [#allocation3], %s160
        %s162 = sand.u32 %s42, 1
        %s163 = smul.addr %s162, 2
        %s164 = scalar_lea.vmem [#allocation2], %s163
        // Predicated region
        $region29: #{tpu_custom_call.1} parent=27 // pred_check
          %p165 = pneg %p55
        $region30: #{tpu_custom_call.1} parent=27 // pred_check_branch
          %167 = sbr.rel (%p165) target = $region32
        $region31: #{tpu_custom_call.1} parent=27 // pred_region
          %168 = dma.done %s161, 32
        $region32: #{tpu_custom_call.1} parent=27 // pred_fallthru
          _
        // Predicated region
        $region33: #{tpu_custom_call.1} parent=27 // pred_check
          %p169 = pneg %p76
        $region34: #{tpu_custom_call.1} parent=27 // pred_check_branch
          %171 = sbr.rel (%p169) target = $region36
        $region35: #{tpu_custom_call.1} parent=27 // pred_region
          %172 = dma.done [#allocation6], 32
        $region36: #{tpu_custom_call.1} parent=27 // pred_fallthru
          _
        %s173 = sand.u32 %s42, 1
        %s174 = scalar_lea.sflag [#allocation3], %s173
        %s175 = sand.u32 %s42, 1
        %s176 = smul.addr %s175, 2
        %s177 = scalar_lea.vmem [#allocation2], %s176
        %p178 = pneg %p55
        %p179 = pneg %p52
        %p180 = pneg %p76
        %p181 = pneg %p73
        %p182 = pneg %p104
        %p183 = pneg %p101
        %s184 = sand.u32 %s91, 1
        %s185 = scalar_lea.sflag [#allocation4], %s184
        %s186 = sand.u32 %s91, 1
        %s187 = smul.addr %s186, 2
        %s188 = scalar_lea.vmem [#allocation7], %s187
        %s189 = smul.u32 %s24, 2
        %v190 = vld [vmem:[%s164] sm:$0x3]
        %s191 = scalar_lea.vmem [#allocation5], %s189
        %v192 = vld [vmem:[%s191] sm:$0x3]
        %v193 = vadd.f32 %v190, %v192
        %194 = vst [vmem:[%s188] sm:$0x3] %v193
        %s195 = sand.u32 %s91, 1
        %s196 = scalar_lea.sflag [#allocation4], %s195
        %s197 = sand.u32 %s91, 1
        %s198 = smul.addr %s197, 2
        %s199 = scalar_lea.vmem [#allocation7], %s198
        // Predicated region
        $region37: #{tpu_custom_call.1} parent=27 // pred_check
          %p200 = pneg %p101
        $region38: #{tpu_custom_call.1} parent=27 // pred_check_branch
          %202 = sbr.rel (%p200) target = $region40
        $region39: #{tpu_custom_call.1} parent=27 // pred_region
          %s204 = ssub.s32 32, 32
          %205 = vsyncadd %s196, %s204
          %s206 = sadd.s32 %s24, %s25
          %s207 = smul.addr %s206, 32
          %s208 = scalar_lea.hbm %s2, %s207
          %s210 = sshll.u32 %s199, 4
          %s211 = int_to_ptr.vmem [resolvable:$true] %s210
          %213 = dma.vmem_to_hbm [thread:$0]  %s211, 32, %s208, %s196
        $region40: #{tpu_custom_call.1} parent=27 // pred_fallthru
          _
      $region28: #{tpu_custom_call.1} parent=5 // pred_fallthru
        _
      %p214 = scmp.le.s32.totalorder 2, %s15
      // Predicated region
      $region41: #{tpu_custom_call.1} parent=5 // pred_check
        %p215 = pneg %p214
      $region42: #{tpu_custom_call.1} parent=5 // pred_check_branch
        %217 = sbr.rel (%p215) target = $region44
      $region43: #{tpu_custom_call.1} parent=5 // pred_region
        %s218 = ssub.s32 %s15, 2
        // Predicated region
        $region45: #{tpu_custom_call.1} parent=43 // pred_check
          %p219 = pneg %p107
        $region46: #{tpu_custom_call.1} parent=43 // pred_check_branch
          %221 = sbr.rel (%p219) target = $region48
        $region47: #{tpu_custom_call.1} parent=43 // pred_region
          %s222 = sand.u32 %s92, 1
          %s223 = scalar_lea.sflag [#allocation4], %s222
          %s224 = sand.u32 %s92, 1
          %s225 = smul.addr %s224, 2
          %s226 = scalar_lea.vmem [#allocation7], %s225
          %227 = dma.done %s223, 32
        $region48: #{tpu_custom_call.1} parent=43 // pred_fallthru
          _
      $region44: #{tpu_custom_call.1} parent=5 // pred_fallthru
        _
    $region6: #{tpu_custom_call.1} parent=1 // loop_footer
      %s19 = sadd.s32 1, %s15
    $region7: #{tpu_custom_call.1} parent=1 // loop_footer_branch
      %14 = sbr.rel target = $region3
    $region8: #{tpu_custom_call.1} parent=1 // loop_exit
      _
    %228 = vsyncpa [#allocation3], 1
    %s229 = scalar_lea.sflag [#allocation3], 1
    %230 = vsyncpa %s229, 1
    %231 = vsyncpa [#allocation6], 1
    %232 = vsyncpa [#allocation4], 1
    %s233 = scalar_lea.sflag [#allocation4], 1
    %234 = vsyncpa %s233, 1

</llo_original>
